<compile_context>
chip_gen: v7x
topology: tpu7x:2x2x1
jax: 0.10.0
libtpu: 0.0.40
codegen_flags: <defaults>
</compile_context>

<pallas_src>
import functools

import jax
import jax.numpy as jnp
from jax import lax
from jax.experimental import pallas as pl
from jax.experimental.pallas import tpu as pltpu

BN_EPS = 1e-5
VMEM_BUDGET_BYTES = 12 * 1024 * 1024  # stays under v5e's 16 MiB default scoped limit


def _round_up(v, m):
    return ((v + m - 1) // m) * m


def _num_tensorcores():
    """Best-effort TensorCore count per chip (2 on v7x-class parts, else 1)."""
    try:
        kind = jax.devices()[0].device_kind.lower()
    except Exception:
        return 1
    return 2 if ("v7" in kind or "7x" in kind) else 1


def _vmem_bytes(nb, cin, hw, cmid_pad, ccls_pad):
    """Rough per-grid-step VMEM estimate (lane/sublane padded, double-buffered I/O)."""
    lane = lambda n: _round_up(n, 128)
    sub = lambda n: _round_up(n, 8)
    x_in = nb * sub(cin) * lane(hw) * 4 * 2            # f32 NCHW input block, 2 bufs
    x_rows = sub(nb * hw) * lane(cin) * (4 + 2)        # transposed rows (f32 + bf16)
    h_act = sub(nb * hw) * cmid_pad * 4                # f32 post-conv activations
    out = sub(nb) * ccls_pad * 4 * 2                   # output block, 2 bufs
    w = 2 * (sub(cin) * cmid_pad * 2                   # bf16 conv1 weight, 2 bufs
             + cmid_pad * ccls_pad * 2                 # bf16 FC weight, 2 bufs
             + 8 * cmid_pad * 4 + 8 * ccls_pad * 4)    # f32 biases
    return x_in + x_rows + h_act + out + w


def _final_module_kernel(x_ref, w1_ref, b1_ref, w2_ref, b2_ref, o_ref, *, nb, hw):
    # x_ref : (nb, Cin, HW)        f32, raw NCHW block (no wrapper transpose/cast)
    # w1_ref: (Cin, Cmid_pad)      bf16, conv1 weight with BN scale folded in
    # b1_ref: (1, Cmid_pad)        f32,  conv1 bias + BN shift folded in
    # w2_ref: (Cmid_pad, Ccls_pad) bf16, FC weight with 1/HW folded in
    # b2_ref: (1, Ccls_pad)        f32
    # o_ref : (nb, Ccls_pad)       f32
    cin = x_ref.shape[1]

    # NCHW -> (rows, channels) entirely in VMEM: batched minor-dim transpose (XLU),
    # merge (nb, HW) into the row axis, cast to bf16 for the fast MXU path.
    xt = jnp.swapaxes(x_ref[...], 1, 2)                      # (nb, HW, Cin)
    xr = xt.reshape(nb * hw, cin).astype(jnp.bfloat16)       # (nb*HW, Cin)

    # 1x1 conv (+ folded bias & inference BN) as one MXU matmul, f32 accumulation.
    h = jnp.dot(xr, w1_ref[...], preferred_element_type=jnp.float32)  # (nb*HW, Cmid_pad)
    h = jnp.maximum(h + b1_ref[...], 0.0)                             # bias + ReLU

    # Global average pool: 1/HW is folded into w2, so a plain sum suffices.
    pooled = jnp.sum(h.reshape(nb, hw, h.shape[-1]), axis=1)          # (nb, Cmid_pad)

    # FC (1x1 conv on pooled features) for all nb images in one bf16 MXU matmul.
    out = jnp.dot(pooled.astype(jnp.bfloat16), w2_ref[...],
                  preferred_element_type=jnp.float32)                 # (nb, Ccls_pad)
    o_ref[...] = out + b2_ref[...]


def final_module_forward(x_nchw, params, *, nb=None):
    """x_nchw: (N, C_in, H, W) float32. Returns (N, num_classes, 1, 1) float32."""
    w1, b1, gamma, beta, run_mean, run_var, w2, b2 = params
    N, Cin, H, W = x_nchw.shape
    HW = H * W
    Cmid = w1.shape[1]
    Ccls = w2.shape[1]

    # Lane-pad the mid and class dims to multiples of 128: lane-dense VPU/XLU work
    # and an unmasked 128-lane output slab (padding contributes exact zeros).
    cmid_pad = _round_up(Cmid, 128)
    ccls_pad = _round_up(Ccls, 128)

    # ---- parameter prep (trace-time, outside the kernel) ----
    # Fold conv1 bias + BatchNorm (inference running stats) into the first matmul.
    scale = gamma * lax.rsqrt(run_var + BN_EPS)                         # (1, Cmid)
    w1p = jnp.zeros((Cin, cmid_pad), jnp.float32).at[:, :Cmid].set(w1 * scale)
    w1p = w1p.astype(jnp.bfloat16)
    b1p = jnp.zeros((1, cmid_pad), jnp.float32).at[:, :Cmid].set(
        (b1 - run_mean) * scale + beta)
    # Fold 1/HW (average pool) into the FC weight; store it in bf16 like w1.
    w2p = jnp.zeros((cmid_pad, ccls_pad), jnp.float32).at[:Cmid, :Ccls].set(
        w2 * (1.0 / HW))
    w2p = w2p.astype(jnp.bfloat16)
    b2p = jnp.zeros((1, ccls_pad), jnp.float32).at[:, :Ccls].set(b2)

    # ---- activation prep: just a free reshape, x stays NCHW f32 in HBM ----
    x = x_nchw.reshape(N, Cin, HW)

    # ---- grid sizing ----
    if nb is None:
        # Prefer the whole batch in a single grid step (v5e/v6e are single-TC, so
        # extra steps are pure ~0.35us overhead), shrinking only if VMEM demands it.
        nb = N
        while nb > 1 and _vmem_bytes(nb, Cin, HW, cmid_pad, ccls_pad) > VMEM_BUDGET_BYTES:
            nb = pl.cdiv(nb, 2)
        # v7x has 2 TensorCores: split across parallel steps, but only when each
        # step still feeds the MXU >= 256 rows.
        ncores = _num_tensorcores()
        if ncores > 1 and nb == N and N >= ncores and (N * HW) // ncores >= 256:
            nb = pl.cdiv(N, ncores)
    nb = max(1, min(int(nb), N))

    n_grid = pl.cdiv(N, nb)
    n_pad = n_grid * nb
    if n_pad != N:
        x = jnp.concatenate([x, jnp.zeros((n_pad - N, Cin, HW), x.dtype)], axis=0)

    kernel = functools.partial(_final_module_kernel, nb=nb, hw=HW)

    flops = 2 * n_pad * HW * Cin * cmid_pad + 2 * n_pad * cmid_pad * ccls_pad
    bytes_accessed = (n_pad * Cin * HW * 4
                      + n_grid * (Cin * cmid_pad * 2 + cmid_pad * ccls_pad * 2
                                  + cmid_pad * 4 + ccls_pad * 4)
                      + n_pad * ccls_pad * 4)

    out = pl.pallas_call(
        kernel,
        out_shape=jax.ShapeDtypeStruct((n_pad, ccls_pad), jnp.float32),
        grid=(n_grid,),
        in_specs=[
            pl.BlockSpec((nb, Cin, HW), lambda i: (i, 0, 0)),      # x (NCHW, f32)
            pl.BlockSpec((Cin, cmid_pad), lambda i: (0, 0)),       # folded conv1 w
            pl.BlockSpec((1, cmid_pad), lambda i: (0, 0)),         # folded conv1 b
            pl.BlockSpec((cmid_pad, ccls_pad), lambda i: (0, 0)),  # FC w (1/HW folded)
            pl.BlockSpec((1, ccls_pad), lambda i: (0, 0)),         # FC bias
        ],
        out_specs=pl.BlockSpec((nb, ccls_pad), lambda i: (i, 0)),
        compiler_params=pltpu.CompilerParams(
            dimension_semantics=("parallel",),
            vmem_limit_bytes=32 * 1024 * 1024),
        cost_estimate=pl.CostEstimate(
            flops=int(flops), transcendentals=0, bytes_accessed=int(bytes_accessed)),
    )(x, w1p, b1p, w2p, b2p)

    # (n_pad, Ccls_pad) -> (N, Ccls, 1, 1), dropping batch/lane padding.
    return out[:N, :Ccls].reshape(N, Ccls, 1, 1)


def init_params(key, c_in, c_mid, c_cls):
    """Deterministic synthetic parameters mirroring the module's __init__.

    Conv weights: kaiming_uniform_ (fan_in, gain=sqrt(2)), bias=0 (stored directly as
    (in, out) matmul matrices). BatchNorm: non-trivial affine + running stats.
    """
    k1, k2, k3, k4, k5, k6 = jax.random.split(key, 6)

    bound1 = (6.0 / c_in) ** 0.5
    w1 = jax.random.uniform(k1, (c_in, c_mid), jnp.float32, -bound1, bound1)
    b1 = jnp.zeros((1, c_mid), jnp.float32)

    gamma = jax.random.uniform(k2, (1, c_mid), jnp.float32, 0.5, 1.5)
    beta = jax.random.uniform(k3, (1, c_mid), jnp.float32, -0.1, 0.1)
    run_mean = jax.random.uniform(k4, (1, c_mid), jnp.float32, -0.2, 0.2)
    run_var = jax.random.uniform(k5, (1, c_mid), jnp.float32, 0.5, 1.5)

    bound2 = (6.0 / c_mid) ** 0.5
    w2 = jax.random.uniform(k6, (c_mid, c_cls), jnp.float32, -bound2, bound2)
    b2 = jnp.zeros((1, c_cls), jnp.float32)

    return (w1, b1, gamma, beta, run_mean, run_var, w2, b2)


def reference_forward(x_nchw, params):
    """Pure-JAX f32 reference of the same forward pass (inference-mode BN)."""
    w1, b1, gamma, beta, run_mean, run_var, w2, b2 = params
    N, Cin, H, W = x_nchw.shape
    x = jnp.transpose(x_nchw, (0, 2, 3, 1)).reshape(N, H * W, Cin)
    h = jnp.einsum("nsc,cm->nsm", x, w1) + b1[None]
    h = (h - run_mean[None]) * (gamma[None] * lax.rsqrt(run_var[None] + BN_EPS)) + beta[None]
    h = jnp.maximum(h, 0.0)
    pooled = jnp.mean(h, axis=1)                          # (N, Cmid)
    out = pooled @ w2 + b2                                # (N, Ccls)
    return out.reshape(N, -1, 1, 1)


if __name__ == "__main__":
    # Small shapes consistent with the module's forward:
    # batch=4, in_channels=32, out_channels(mid)=64, num_classes=16, spatial 8x8
    N, C_IN, C_MID, C_CLS, H, W = 4, 32, 64, 16, 8, 8

    key = jax.random.PRNGKey(0)
    k_x, k_p = jax.random.split(key)
    x = jax.random.normal(k_x, (N, C_IN, H, W), jnp.float32)
    params = init_params(k_p, C_IN, C_MID, C_CLS)

    out = final_module_forward(x, params)
    out = jax.block_until_ready(out)

    ref = reference_forward(x, params)
    assert out.shape == (N, C_CLS, 1, 1), out.shape
    # Tolerance loosened because both matmuls run on the bf16 MXU path (f32 accum).
    assert jnp.allclose(out, ref, atol=1e-1, rtol=5e-2), "mismatch vs JAX reference"

    print("KERNEL_OK")
</pallas_src>

<mosaic_0001>
module attributes {stable_mosaic.version = 11 : i64} {
  func.func @_final_module_kernel(%arg0: i32, %arg1: memref<4x32x64xf32, #tpu.memory_space<vmem>>, %arg2: memref<32x128xbf16, #tpu.memory_space<vmem>>, %arg3: memref<1x128xf32, #tpu.memory_space<vmem>>, %arg4: memref<128x128xbf16, #tpu.memory_space<vmem>>, %arg5: memref<1x128xf32, #tpu.memory_space<vmem>>, %arg6: memref<4x128xf32, #tpu.memory_space<vmem>>) attributes {dimension_semantics = [#tpu.dimension_semantics<parallel>], iteration_bounds = array<i64: 1>, scalar_prefetch = 0 : i64, scratch_operands = 0 : i64, tpu.core_type = #tpu.core_type<tc>, window_params = [{transform_indices = @transform_0, window_bounds = array<i64: 4, 32, 64>}, {pipeline_mode = #tpu.pipeline_mode<synchronous>, transform_indices = @transform_1, window_bounds = array<i64: 32, 128>}, {pipeline_mode = #tpu.pipeline_mode<synchronous>, transform_indices = @transform_2, window_bounds = array<i64: 1, 128>}, {pipeline_mode = #tpu.pipeline_mode<synchronous>, transform_indices = @transform_3, window_bounds = array<i64: 128, 128>}, {pipeline_mode = #tpu.pipeline_mode<synchronous>, transform_indices = @transform_4, window_bounds = array<i64: 1, 128>}, {transform_indices = @transform_5, window_bounds = array<i64: 4, 128>}]} {
    %c0 = arith.constant 0 : index
    %c0_0 = arith.constant 0 : index
    %c0_1 = arith.constant 0 : index
    %0 = vector.load %arg1[%c0, %c0_0, %c0_1] : memref<4x32x64xf32, #tpu.memory_space<vmem>>, vector<4x32x64xf32>
    %1 = tpu.transpose %0, [0, 2, 1] : vector<4x32x64xf32> -> vector<4x64x32xf32>
    %2 = vector.shape_cast %1 : vector<4x64x32xf32> to vector<256x32xf32>
    %3 = arith.truncf %2 : vector<256x32xf32> to vector<256x32xbf16>
    %c0_2 = arith.constant 0 : index
    %c0_3 = arith.constant 0 : index
    %4 = vector.load %arg2[%c0_2, %c0_3] : memref<32x128xbf16, #tpu.memory_space<vmem>>, vector<32x128xbf16>
    %cst = arith.constant dense<0.000000e+00> : vector<256x128xf32>
    %5 = tpu.matmul %3, %4, %cst {dimension_numbers = #tpu.dot_dimension_numbers<[1], [0], [0], [1], [0, 0, 1, 1], [], []>} : vector<256x32xbf16>, vector<32x128xbf16>, vector<256x128xf32> -> vector<256x128xf32>
    %c0_4 = arith.constant 0 : index
    %c0_5 = arith.constant 0 : index
    %6 = vector.load %arg3[%c0_4, %c0_5] : memref<1x128xf32, #tpu.memory_space<vmem>>, vector<1x128xf32>
    %7 = vector.broadcast %6 : vector<1x128xf32> to vector<256x128xf32>
    %8 = arith.addf %5, %7 : vector<256x128xf32>
    %cst_6 = arith.constant 0.000000e+00 : f32
    %9 = vector.broadcast %cst_6 : f32 to vector<256x128xf32>
    %10 = arith.maximumf %8, %9 : vector<256x128xf32>
    %11 = vector.shape_cast %10 : vector<256x128xf32> to vector<4x64x128xf32>
    %cst_7 = arith.constant dense<0.000000e+00> : vector<4x128xf32>
    %12 = vector.multi_reduction <add>, %11, %cst_7 [1] : vector<4x64x128xf32> to vector<4x128xf32>
    %13 = arith.truncf %12 : vector<4x128xf32> to vector<4x128xbf16>
    %c0_8 = arith.constant 0 : index
    %c0_9 = arith.constant 0 : index
    %14 = vector.load %arg4[%c0_8, %c0_9] : memref<128x128xbf16, #tpu.memory_space<vmem>>, vector<128x128xbf16>
    %cst_10 = arith.constant dense<0.000000e+00> : vector<4x128xf32>
    %15 = tpu.matmul %13, %14, %cst_10 {dimension_numbers = #tpu.dot_dimension_numbers<[1], [0], [0], [1], [0, 0, 1, 1], [], []>} : vector<4x128xbf16>, vector<128x128xbf16>, vector<4x128xf32> -> vector<4x128xf32>
    %c0_11 = arith.constant 0 : index
    %c0_12 = arith.constant 0 : index
    %16 = vector.load %arg5[%c0_11, %c0_12] : memref<1x128xf32, #tpu.memory_space<vmem>>, vector<1x128xf32>
    %17 = vector.broadcast %16 : vector<1x128xf32> to vector<4x128xf32>
    %18 = arith.addf %15, %17 : vector<4x128xf32>
    %c0_13 = arith.constant 0 : index
    %c0_14 = arith.constant 0 : index
    %19 = vector.load %arg6[%c0_13, %c0_14] : memref<4x128xf32, #tpu.memory_space<vmem>>, vector<4x128xf32>
    tpu.vector_store %arg6[%c0_13, %c0_14], %18 {strides = array<i32>} : memref<4x128xf32, #tpu.memory_space<vmem>>, vector<4x128xf32>,
    return
  }
  func.func @transform_0(%arg0: i32) -> (i32, i32, i32) {
    %c0_i32 = arith.constant 0 : i32
    %c0_i32_0 = arith.constant 0 : i32
    %c0_i32_1 = arith.constant 0 : i32
    return %arg0, %c0_i32, %c0_i32_0 : i32, i32, i32
  }
  func.func @transform_1(%arg0: i32) -> (i32, i32) {
    %c0_i32 = arith.constant 0 : i32
    %c0_i32_0 = arith.constant 0 : i32
    %c0_i32_1 = arith.constant 0 : i32
    return %c0_i32, %c0_i32_0 : i32, i32
  }
  func.func @transform_2(%arg0: i32) -> (i32, i32) {
    %c0_i32 = arith.constant 0 : i32
    %c0_i32_0 = arith.constant 0 : i32
    %c0_i32_1 = arith.constant 0 : i32
    return %c0_i32, %c0_i32_0 : i32, i32
  }
  func.func @transform_3(%arg0: i32) -> (i32, i32) {
    %c0_i32 = arith.constant 0 : i32
    %c0_i32_0 = arith.constant 0 : i32
    %c0_i32_1 = arith.constant 0 : i32
    return %c0_i32, %c0_i32_0 : i32, i32
  }
  func.func @transform_4(%arg0: i32) -> (i32, i32) {
    %c0_i32 = arith.constant 0 : i32
    %c0_i32_0 = arith.constant 0 : i32
    %c0_i32_1 = arith.constant 0 : i32
    return %c0_i32, %c0_i32_0 : i32, i32
  }
  func.func @transform_5(%arg0: i32) -> (i32, i32) {
    %c0_i32 = arith.constant 0 : i32
    %c0_i32_0 = arith.constant 0 : i32
    return %arg0, %c0_i32 : i32, i32
  }
}

</mosaic_0001>

<llo_original>
// kernel: tpu_custom_call.1
$region0: #{tpu_custom_call.1}
  #allocation0 [shape = 'u32[]', space=smem, size = 0x4, offset = 0x4, fixed_abs, tag = 'smem constant byte address 0x4 - core index']
  #allocation1 [shape = 'u32[144,128]{1,0:T(1,128)}', space=vmem, size = 0x12000, scoped, tag = 'internal scratch']
  %s0 = inlined_call_operand.hbm [shape: f32[4,32,64], index: 0, kind: input, shape index: {}]
  %s1 = inlined_call_operand.hbm [shape: bf16[32,128], index: 1, kind: input, shape index: {}]
  %s2 = inlined_call_operand.vmem [shape: f32[1,128], index: 2, kind: input, shape index: {}]
  %s3 = inlined_call_operand.hbm [shape: bf16[128,128], index: 3, kind: input, shape index: {}]
  %s4 = inlined_call_operand.vmem [shape: f32[1,128], index: 4, kind: input, shape index: {}]
  %s5 = inlined_call_operand.hbm [shape: f32[4,128], index: 5, kind: output, shape index: {}]
  %s6 = sld [smem:[#allocation0]]
  $region42: #{tpu_custom_call.1} parent=0
    _
  %s8 = ssub.s32 1, %s6
  %s9 = scalar_select 0, %s8, %s6
  $region1: #{tpu_custom_call.1} parent=0
    #allocation2 [shape = 'u8[65536]{0}', space=vmem, size = 0x10000, scoped, tag = 'input window, operand 0, single buffered']
    #allocation3 [shape = 's32[1]{0}', space=sflag, size = 0x4, scoped, tag = 'scoped memory for tpu_custom_call.1']
    #allocation4 [shape = 's32[1]{0}', space=sflag, size = 0x4, scoped, tag = 'scoped memory for tpu_custom_call.1']
    #allocation5 [shape = 'u8[8192]{0}', space=vmem, size = 0x2000, scoped, tag = 'input window, operand 1, single buffered']
    #allocation6 [shape = 's32[1]{0}', space=sflag, size = 0x4, scoped, tag = 'scoped memory for tpu_custom_call.1']
    #allocation7 [shape = 'u8[32768]{0}', space=vmem, size = 0x8000, scoped, tag = 'input window, operand 3, single buffered']
    #allocation8 [shape = 'u8[2048]{0}', space=vmem, size = 0x800, scoped, tag = 'output window, operand 0, single buffered']
    %10 = vsyncpa [#allocation3], 0
    %11 = vsyncpa [#allocation6], 0
    %12 = vsyncpa [#allocation4], 0
    // Predicated region
    $region2: #{tpu_custom_call.1} parent=1 // pred_check
      _
    $region3: #{tpu_custom_call.1} parent=1 // pred_check_branch
      %14 = sbr.rel (0) target = $region5
    $region4: #{tpu_custom_call.1} parent=1 // pred_region
      %s16 = ssub.s32 2048, 2048
      %17 = vsyncadd [#allocation3], %s16
      %s18 = sshll.u32 [#allocation2], 4
      %s19 = int_to_ptr.vmem [resolvable:$true] %s18
      %24 = dma.hbm_to_vmem [thread:$0]  %s0, 2048, %s19, [#allocation3], 128, 128, 8
    $region5: #{tpu_custom_call.1} parent=1 // pred_fallthru
      _
    // Predicated region
    $region6: #{tpu_custom_call.1} parent=1 // pred_check
      _
    $region7: #{tpu_custom_call.1} parent=1 // pred_check_branch
      %26 = sbr.rel (0) target = $region9
    $region8: #{tpu_custom_call.1} parent=1 // pred_region
      %s28 = ssub.s32 256, 256
      %29 = vsyncadd [#allocation6], %s28
      %s30 = sshll.u32 [#allocation5], 4
      %s31 = int_to_ptr.vmem [resolvable:$true] %s30
      %36 = dma.hbm_to_vmem [thread:$0]  %s1, 256, %s31, [#allocation6], 64, 64, 4
    $region9: #{tpu_custom_call.1} parent=1 // pred_fallthru
      _
    // Predicated region
    $region10: #{tpu_custom_call.1} parent=1 // pred_check
      _
    $region11: #{tpu_custom_call.1} parent=1 // pred_check_branch
      %38 = sbr.rel (0) target = $region13
    $region12: #{tpu_custom_call.1} parent=1 // pred_region
      _
    $region13: #{tpu_custom_call.1} parent=1 // pred_fallthru
      _
    // Predicated region
    $region14: #{tpu_custom_call.1} parent=1 // pred_check
      _
    $region15: #{tpu_custom_call.1} parent=1 // pred_check_branch
      %40 = sbr.rel (0) target = $region17
    $region16: #{tpu_custom_call.1} parent=1 // pred_region
      %s42 = ssub.s32 1024, 1024
      %43 = vsyncadd [#allocation6], %s42
      %s44 = sshll.u32 [#allocation7], 4
      %s45 = int_to_ptr.vmem [resolvable:$true] %s44
      %50 = dma.hbm_to_vmem [thread:$0]  %s3, 1024, %s45, [#allocation6], 64, 64, 4
    $region17: #{tpu_custom_call.1} parent=1 // pred_fallthru
      _
    // Predicated region
    $region18: #{tpu_custom_call.1} parent=1 // pred_check
      _
    $region19: #{tpu_custom_call.1} parent=1 // pred_check_branch
      %52 = sbr.rel (0) target = $region21
    $region20: #{tpu_custom_call.1} parent=1 // pred_region
      _
    $region21: #{tpu_custom_call.1} parent=1 // pred_fallthru
      _
    // Predicated region
    $region22: #{tpu_custom_call.1} parent=1 // pred_check
      _
    $region23: #{tpu_custom_call.1} parent=1 // pred_check_branch
      %54 = sbr.rel (0) target = $region25
    $region24: #{tpu_custom_call.1} parent=1 // pred_region
      %55 = dma.done [#allocation3], 2048
    $region25: #{tpu_custom_call.1} parent=1 // pred_fallthru
      _
    // Predicated region
    $region26: #{tpu_custom_call.1} parent=1 // pred_check
      _
    $region27: #{tpu_custom_call.1} parent=1 // pred_check_branch
      %57 = sbr.rel (0) target = $region29
    $region28: #{tpu_custom_call.1} parent=1 // pred_region
      %58 = dma.done [#allocation6], 256
    $region29: #{tpu_custom_call.1} parent=1 // pred_fallthru
      _
    // Predicated region
    $region30: #{tpu_custom_call.1} parent=1 // pred_check
      _
    $region31: #{tpu_custom_call.1} parent=1 // pred_check_branch
      %60 = sbr.rel (0) target = $region33
    $region32: #{tpu_custom_call.1} parent=1 // pred_region
      %61 = dma.done [#allocation6], 1024
    $region33: #{tpu_custom_call.1} parent=1 // pred_fallthru
      _
    %v63 = vld [vmem:[#allocation2] sm:$0xff]
    %v64 = vld [vmem:[#allocation2 + $0x8] sm:$0xff]
    %v65 = vld [vmem:[#allocation2 + $0x10] sm:$0xff]
    %v66 = vld [vmem:[#allocation2 + $0x18] sm:$0xff]
    %v67 = vld [vmem:[#allocation2 + $0x20] sm:$0xff]
    %v68 = vld [vmem:[#allocation2 + $0x28] sm:$0xff]
    %v69 = vld [vmem:[#allocation2 + $0x30] sm:$0xff]
    %v70 = vld [vmem:[#allocation2 + $0x38] sm:$0xff]
    %v71 = vld [vmem:[#allocation2 + $0x40] sm:$0xff]
    %v72 = vld [vmem:[#allocation2 + $0x48] sm:$0xff]
    %v73 = vld [vmem:[#allocation2 + $0x50] sm:$0xff]
    %v74 = vld [vmem:[#allocation2 + $0x58] sm:$0xff]
    %v75 = vld [vmem:[#allocation2 + $0x60] sm:$0xff]
    %v76 = vld [vmem:[#allocation2 + $0x68] sm:$0xff]
    %v77 = vld [vmem:[#allocation2 + $0x70] sm:$0xff]
    %v78 = vld [vmem:[#allocation2 + $0x78] sm:$0xff]
    %79 = vxpose.xlu0.b32.start [1/16] %v63, 128
    %80 = vxpose.xlu0.b32.cont [2/16] %v64, 128
    %81 = vxpose.xlu0.b32.cont [3/16] %v65, 128
    %82 = vxpose.xlu0.b32.cont [4/16] %v66, 128
    %83 = vxpose.xlu0.b32.cont [5/16] 0.0, 128
    %84 = vxpose.xlu0.b32.cont [6/16] 0.0, 128
    %85 = vxpose.xlu0.b32.cont [7/16] 0.0, 128
    %86 = vxpose.xlu0.b32.cont [8/16] 0.0, 128
    %87 = vxpose.xlu0.b32.cont [9/16] 0.0, 128
    %88 = vxpose.xlu0.b32.cont [10/16] 0.0, 128
    %89 = vxpose.xlu0.b32.cont [11/16] 0.0, 128
    %90 = vxpose.xlu0.b32.cont [12/16] 0.0, 128
    %91 = vxpose.xlu0.b32.cont [13/16] 0.0, 128
    %92 = vxpose.xlu0.b32.cont [14/16] 0.0, 128
    %93 = vxpose.xlu0.b32.cont [15/16] 0.0, 128
    %94 = vxpose.xlu0.b32.end [16/16] 0.0, 128
    %v95 = vpop.trf.xlu0
    %v96 = vpop.trf.xlu0
    %v97 = vpop.trf.xlu0
    %v98 = vpop.trf.xlu0
    %v99 = vpop.trf.xlu0
    %v100 = vpop.trf.xlu0
    %v101 = vpop.trf.xlu0
    %v102 = vpop.trf.xlu0
    %v103 = vpop.trf.xlu0
    %v104 = vpop.trf.xlu0
    %v105 = vpop.trf.xlu0
    %v106 = vpop.trf.xlu0
    %v107 = vpop.trf.xlu0
    %v108 = vpop.trf.xlu0
    %v109 = vpop.trf.xlu0
    %v110 = vpop.trf.xlu0
    %111 = vxpose.xlu0.b32.start [1/16] %v67, 128
    %112 = vxpose.xlu0.b32.cont [2/16] %v68, 128
    %113 = vxpose.xlu0.b32.cont [3/16] %v69, 128
    %114 = vxpose.xlu0.b32.cont [4/16] %v70, 128
    %115 = vxpose.xlu0.b32.cont [5/16] 0.0, 128
    %116 = vxpose.xlu0.b32.cont [6/16] 0.0, 128
    %117 = vxpose.xlu0.b32.cont [7/16] 0.0, 128
    %118 = vxpose.xlu0.b32.cont [8/16] 0.0, 128
    %119 = vxpose.xlu0.b32.cont [9/16] 0.0, 128
    %120 = vxpose.xlu0.b32.cont [10/16] 0.0, 128
    %121 = vxpose.xlu0.b32.cont [11/16] 0.0, 128
    %122 = vxpose.xlu0.b32.cont [12/16] 0.0, 128
    %123 = vxpose.xlu0.b32.cont [13/16] 0.0, 128
    %124 = vxpose.xlu0.b32.cont [14/16] 0.0, 128
    %125 = vxpose.xlu0.b32.cont [15/16] 0.0, 128
    %126 = vxpose.xlu0.b32.end [16/16] 0.0, 128
    %v127 = vpop.trf.xlu0
    %v128 = vpop.trf.xlu0
    %v129 = vpop.trf.xlu0
    %v130 = vpop.trf.xlu0
    %v131 = vpop.trf.xlu0
    %v132 = vpop.trf.xlu0
    %v133 = vpop.trf.xlu0
    %v134 = vpop.trf.xlu0
    %v135 = vpop.trf.xlu0
    %v136 = vpop.trf.xlu0
    %v137 = vpop.trf.xlu0
    %v138 = vpop.trf.xlu0
    %v139 = vpop.trf.xlu0
    %v140 = vpop.trf.xlu0
    %v141 = vpop.trf.xlu0
    %v142 = vpop.trf.xlu0
    %143 = vxpose.xlu0.b32.start [1/16] %v71, 128
    %144 = vxpose.xlu0.b32.cont [2/16] %v72, 128
    %145 = vxpose.xlu0.b32.cont [3/16] %v73, 128
    %146 = vxpose.xlu0.b32.cont [4/16] %v74, 128
    %147 = vxpose.xlu0.b32.cont [5/16] 0.0, 128
    %148 = vxpose.xlu0.b32.cont [6/16] 0.0, 128
    %149 = vxpose.xlu0.b32.cont [7/16] 0.0, 128
    %150 = vxpose.xlu0.b32.cont [8/16] 0.0, 128
    %151 = vxpose.xlu0.b32.cont [9/16] 0.0, 128
    %152 = vxpose.xlu0.b32.cont [10/16] 0.0, 128
    %153 = vxpose.xlu0.b32.cont [11/16] 0.0, 128
    %154 = vxpose.xlu0.b32.cont [12/16] 0.0, 128
    %155 = vxpose.xlu0.b32.cont [13/16] 0.0, 128
    %156 = vxpose.xlu0.b32.cont [14/16] 0.0, 128
    %157 = vxpose.xlu0.b32.cont [15/16] 0.0, 128
    %158 = vxpose.xlu0.b32.end [16/16] 0.0, 128
    %v159 = vpop.trf.xlu0
    %v160 = vpop.trf.xlu0
    %v161 = vpop.trf.xlu0
    %v162 = vpop.trf.xlu0
    %v163 = vpop.trf.xlu0
    %v164 = vpop.trf.xlu0
    %v165 = vpop.trf.xlu0
    %v166 = vpop.trf.xlu0
    %v167 = vpop.trf.xlu0
    %v168 = vpop.trf.xlu0
    %v169 = vpop.trf.xlu0
    %v170 = vpop.trf.xlu0
    %v171 = vpop.trf.xlu0
    %v172 = vpop.trf.xlu0
    %v173 = vpop.trf.xlu0
    %v174 = vpop.trf.xlu0
    %175 = vxpose.xlu0.b32.start [1/16] %v75, 128
    %176 = vxpose.xlu0.b32.cont [2/16] %v76, 128
    %177 = vxpose.xlu0.b32.cont [3/16] %v77, 128
    %178 = vxpose.xlu0.b32.cont [4/16] %v78, 128
    %179 = vxpose.xlu0.b32.cont [5/16] 0.0, 128
    %180 = vxpose.xlu0.b32.cont [6/16] 0.0, 128
    %181 = vxpose.xlu0.b32.cont [7/16] 0.0, 128
    %182 = vxpose.xlu0.b32.cont [8/16] 0.0, 128
    %183 = vxpose.xlu0.b32.cont [9/16] 0.0, 128
    %184 = vxpose.xlu0.b32.cont [10/16] 0.0, 128
    %185 = vxpose.xlu0.b32.cont [11/16] 0.0, 128
    %186 = vxpose.xlu0.b32.cont [12/16] 0.0, 128
    %187 = vxpose.xlu0.b32.cont [13/16] 0.0, 128
    %188 = vxpose.xlu0.b32.cont [14/16] 0.0, 128
    %189 = vxpose.xlu0.b32.cont [15/16] 0.0, 128
    %190 = vxpose.xlu0.b32.end [16/16] 0.0, 128
    %v191 = vpop.trf.xlu0
    %v192 = vpop.trf.xlu0
    %v193 = vpop.trf.xlu0
    %v194 = vpop.trf.xlu0
    %v195 = vpop.trf.xlu0
    %v196 = vpop.trf.xlu0
    %v197 = vpop.trf.xlu0
    %v198 = vpop.trf.xlu0
    %v199 = vpop.trf.xlu0
    %v200 = vpop.trf.xlu0
    %v201 = vpop.trf.xlu0
    %v202 = vpop.trf.xlu0
    %v203 = vpop.trf.xlu0
    %v204 = vpop.trf.xlu0
    %v205 = vpop.trf.xlu0
    %v206 = vpop.trf.xlu0
    %v207 = vpack.c.bf16 %v96, %v95
    %v208 = vpack.c.bf16 %v98, %v97
    %v209 = vpack.c.bf16 %v100, %v99
    %v210 = vpack.c.bf16 %v102, %v101
    %v211 = vpack.c.bf16 %v128, %v127
    %v212 = vpack.c.bf16 %v130, %v129
    %v213 = vpack.c.bf16 %v132, %v131
    %v214 = vpack.c.bf16 %v134, %v133
    %v215 = vpack.c.bf16 %v160, %v159
    %v216 = vpack.c.bf16 %v162, %v161
    %v217 = vpack.c.bf16 %v164, %v163
    %v218 = vpack.c.bf16 %v166, %v165
    %v219 = vpack.c.bf16 %v192, %v191
    %v220 = vpack.c.bf16 %v194, %v193
    %v221 = vpack.c.bf16 %v196, %v195
    %v222 = vpack.c.bf16 %v198, %v197
    %v223 = vld [vmem:[#allocation5] sm:$0xf]
    %v224 = vld [vmem:[#allocation5 + $0x4] sm:$0xf]
    %v225 = vld [vmem:[#allocation5 + $0x8] sm:$0xf]
    %v226 = vld [vmem:[#allocation5 + $0xc] sm:$0xf]
    %v227 = vld [vmem:[%s2] sm:$0x1]
    %v229 = vlaneseq
    %v230 = vshrl.u32 %v229, 7
    %v231 = vsub.s32 0, %v230
    %v232 = vrot.slane %v227, %v231
    %v238 = vunpack.c.l.b16 %v223
    %v239 = vunpack.c.l.b16 %v224
    %v240 = vunpack.c.l.b16 %v225
    %v241 = vunpack.c.l.b16 %v226
    %v242 = vpack.c.b16 %v239, %v238
    %v243 = vpack.c.b16 %v241, %v240
    %vm246 = vcmask 261120
    %v248 = vsel %vm246, %v207, 0
    %v251 = vsel %vm246, %v208, 0
    %v254 = vsel %vm246, %v209, 0
    %v257 = vsel %vm246, %v210, 0
    %v260 = vsel %vm246, %v211, 0
    %v263 = vsel %vm246, %v212, 0
    %v266 = vsel %vm246, %v213, 0
    %v269 = vsel %vm246, %v214, 0
    %v272 = vsel %vm246, %v215, 0
    %v275 = vsel %vm246, %v216, 0
    %v278 = vsel %vm246, %v217, 0
    %v281 = vsel %vm246, %v218, 0
    %v284 = vsel %vm246, %v219, 0
    %v287 = vsel %vm246, %v220, 0
    %v290 = vsel %vm246, %v221, 0
    %v293 = vsel %vm246, %v222, 0
    %295 = vmatprep.subr.bf16.mxu0 0
    %296 = vmatpush1.bf16.msra.mxu0 %v242
    %297 = vmatprep.subr.bf16.mxu0 0
    %298 = vmatpush1.bf16.msra.mxu0 %v243
    %299 = vmatprep.subr.bf16.mxu0 0
    %300 = vmatpush1.bf16.msra.mxu0 0
    %301 = vmatprep.subr.bf16.mxu0 0
    %302 = vmatpush1.bf16.msra.mxu0 0
    %303 = vmatprep.subr.bf16.mxu0 0
    %304 = vmatpush1.bf16.msra.mxu0 0
    %305 = vmatprep.subr.bf16.mxu0 0
    %306 = vmatpush1.bf16.msra.mxu0 0
    %307 = vmatprep.subr.bf16.mxu0 0
    %308 = vmatpush1.bf16.msra.mxu0 0
    %309 = vmatprep.subr.bf16.mxu0 0
    %310 = vmatpush1.bf16.msra.mxu0 0
    %311 = vmatprep.subr.bf16.mxu0 0
    %312 = vmatpush1.bf16.msra.mxu0 0
    %313 = vmatprep.subr.bf16.mxu0 0
    %314 = vmatpush1.bf16.msra.mxu0 0
    %315 = vmatprep.subr.bf16.mxu0 0
    %316 = vmatpush1.bf16.msra.mxu0 0
    %317 = vmatprep.subr.bf16.mxu0 0
    %318 = vmatpush1.bf16.msra.mxu0 0
    %319 = vmatprep.subr.bf16.mxu0 0
    %320 = vmatpush1.bf16.msra.mxu0 0
    %321 = vmatprep.subr.bf16.mxu0 0
    %322 = vmatpush1.bf16.msra.mxu0 0
    %323 = vmatprep.subr.bf16.mxu0 0
    %324 = vmatpush1.bf16.msra.mxu0 0
    %325 = vmatprep.subr.bf16.mxu0 0
    %326 = vmatpush1.bf16.msra.mxu0 0
    %327 = vmatprep.mubr.bf16.mxu0 0
    %328 = vmatmul.mubr.bf16.gmra.mrb[0].mxu0 %v248
    %v329 = vpop.f32.mrb[0].mxu0
    %v330 = vadd.f32 %v232, %v329
    %v331 = vpop.f32.mrb[0].mxu0
    %v332 = vpop.f32.mrb[0].mxu0
    %v333 = vadd.f32 %v232, %v332
    %v334 = vpop.f32.mrb[0].mxu0
    %335 = vmatprep.mubr.bf16.mxu0 0
    %336 = vmatmul.mubr.bf16.gmra.mrb[0].mxu0 %v251
    %v337 = vpop.f32.mrb[0].mxu0
    %v338 = vadd.f32 %v232, %v337
    %v339 = vpop.f32.mrb[0].mxu0
    %v340 = vpop.f32.mrb[0].mxu0
    %v341 = vadd.f32 %v232, %v340
    %v342 = vpop.f32.mrb[0].mxu0
    %343 = vmatprep.mubr.bf16.mxu0 0
    %344 = vmatmul.mubr.bf16.gmra.mrb[0].mxu0 %v254
    %v345 = vpop.f32.mrb[0].mxu0
    %v346 = vadd.f32 %v232, %v345
    %v347 = vpop.f32.mrb[0].mxu0
    %v348 = vpop.f32.mrb[0].mxu0
    %v349 = vadd.f32 %v232, %v348
    %v350 = vpop.f32.mrb[0].mxu0
    %351 = vmatprep.mubr.bf16.mxu0 0
    %352 = vmatmul.mubr.bf16.gmra.mrb[0].mxu0 %v257
    %v353 = vpop.f32.mrb[0].mxu0
    %v354 = vadd.f32 %v232, %v353
    %v355 = vpop.f32.mrb[0].mxu0
    %v356 = vpop.f32.mrb[0].mxu0
    %v357 = vadd.f32 %v232, %v356
    %v358 = vpop.f32.mrb[0].mxu0
    %359 = vmatprep.mubr.bf16.mxu0 0
    %360 = vmatmul.mubr.bf16.gmra.mrb[0].mxu0 %v260
    %v361 = vpop.f32.mrb[0].mxu0
    %v362 = vadd.f32 %v232, %v361
    %v363 = vpop.f32.mrb[0].mxu0
    %v364 = vpop.f32.mrb[0].mxu0
    %v365 = vadd.f32 %v232, %v364
    %v366 = vpop.f32.mrb[0].mxu0
    %367 = vmatprep.mubr.bf16.mxu0 0
    %368 = vmatmul.mubr.bf16.gmra.mrb[0].mxu0 %v263
    %v369 = vpop.f32.mrb[0].mxu0
    %v370 = vadd.f32 %v232, %v369
    %v371 = vpop.f32.mrb[0].mxu0
    %v372 = vpop.f32.mrb[0].mxu0
    %v373 = vadd.f32 %v232, %v372
    %v374 = vpop.f32.mrb[0].mxu0
    %375 = vmatprep.mubr.bf16.mxu0 0
    %376 = vmatmul.mubr.bf16.gmra.mrb[0].mxu0 %v266
    %v377 = vpop.f32.mrb[0].mxu0
    %v378 = vadd.f32 %v232, %v377
    %v379 = vpop.f32.mrb[0].mxu0
    %v380 = vpop.f32.mrb[0].mxu0
    %v381 = vadd.f32 %v232, %v380
    %v382 = vpop.f32.mrb[0].mxu0
    %383 = vmatprep.mubr.bf16.mxu0 0
    %384 = vmatmul.mubr.bf16.gmra.mrb[0].mxu0 %v269
    %v385 = vpop.f32.mrb[0].mxu0
    %v386 = vadd.f32 %v232, %v385
    %v387 = vpop.f32.mrb[0].mxu0
    %v388 = vpop.f32.mrb[0].mxu0
    %v389 = vadd.f32 %v232, %v388
    %v390 = vpop.f32.mrb[0].mxu0
    %391 = vmatprep.mubr.bf16.mxu0 0
    %392 = vmatmul.mubr.bf16.gmra.mrb[0].mxu0 %v272
    %v393 = vpop.f32.mrb[0].mxu0
    %v394 = vadd.f32 %v232, %v393
    %v395 = vpop.f32.mrb[0].mxu0
    %v396 = vpop.f32.mrb[0].mxu0
    %v397 = vadd.f32 %v232, %v396
    %v398 = vpop.f32.mrb[0].mxu0
    %399 = vmatprep.mubr.bf16.mxu0 0
    %400 = vmatmul.mubr.bf16.gmra.mrb[0].mxu0 %v275
    %v401 = vpop.f32.mrb[0].mxu0
    %v402 = vadd.f32 %v232, %v401
    %v403 = vpop.f32.mrb[0].mxu0
    %v404 = vpop.f32.mrb[0].mxu0
    %v405 = vadd.f32 %v232, %v404
    %v406 = vpop.f32.mrb[0].mxu0
    %407 = vmatprep.mubr.bf16.mxu0 0
    %408 = vmatmul.mubr.bf16.gmra.mrb[0].mxu0 %v278
    %v409 = vpop.f32.mrb[0].mxu0
    %v410 = vadd.f32 %v232, %v409
    %v411 = vpop.f32.mrb[0].mxu0
    %v412 = vpop.f32.mrb[0].mxu0
    %v413 = vadd.f32 %v232, %v412
    %v414 = vpop.f32.mrb[0].mxu0
    %415 = vmatprep.mubr.bf16.mxu0 0
    %416 = vmatmul.mubr.bf16.gmra.mrb[0].mxu0 %v281
    %v417 = vpop.f32.mrb[0].mxu0
    %v418 = vadd.f32 %v232, %v417
    %v419 = vpop.f32.mrb[0].mxu0
    %v420 = vpop.f32.mrb[0].mxu0
    %v421 = vadd.f32 %v232, %v420
    %v422 = vpop.f32.mrb[0].mxu0
    %423 = vmatprep.mubr.bf16.mxu0 0
    %424 = vmatmul.mubr.bf16.gmra.mrb[0].mxu0 %v284
    %v425 = vpop.f32.mrb[0].mxu0
    %v426 = vadd.f32 %v232, %v425
    %v427 = vpop.f32.mrb[0].mxu0
    %v428 = vpop.f32.mrb[0].mxu0
    %v429 = vadd.f32 %v232, %v428
    %v430 = vpop.f32.mrb[0].mxu0
    %431 = vmatprep.mubr.bf16.mxu0 0
    %432 = vmatmul.mubr.bf16.gmra.mrb[0].mxu0 %v287
    %v433 = vpop.f32.mrb[0].mxu0
    %v434 = vadd.f32 %v232, %v433
    %v435 = vpop.f32.mrb[0].mxu0
    %v436 = vpop.f32.mrb[0].mxu0
    %v437 = vadd.f32 %v232, %v436
    %v438 = vpop.f32.mrb[0].mxu0
    %439 = vmatprep.mubr.bf16.mxu0 0
    %440 = vmatmul.mubr.bf16.gmra.mrb[0].mxu0 %v290
    %v441 = vpop.f32.mrb[0].mxu0
    %v442 = vadd.f32 %v232, %v441
    %v443 = vpop.f32.mrb[0].mxu0
    %v444 = vpop.f32.mrb[0].mxu0
    %v445 = vadd.f32 %v232, %v444
    %v446 = vpop.f32.mrb[0].mxu0
    %447 = vmatprep.mubr.bf16.mxu0 0
    %448 = vmatmul.mubr.bf16.gmra.mrb[0].mxu0 %v293
    %v449 = vpop.f32.mrb[0].mxu0
    %v450 = vadd.f32 %v232, %v449
    %v451 = vpop.f32.mrb[0].mxu0
    %v452 = vpop.f32.mrb[0].mxu0
    %v453 = vadd.f32 %v232, %v452
    %v454 = vpop.f32.mrb[0].mxu0
    %455 = vdwg.mxu0
    %v456 = vmax.f32 %v330, 0.0
    %v457 = vmax.f32 %v333, 0.0
    %v458 = vmax.f32 %v338, 0.0
    %v459 = vmax.f32 %v341, 0.0
    %v460 = vmax.f32 %v346, 0.0
    %v461 = vmax.f32 %v349, 0.0
    %v462 = vmax.f32 %v354, 0.0
    %v463 = vmax.f32 %v357, 0.0
    %v464 = vmax.f32 %v362, 0.0
    %v465 = vmax.f32 %v365, 0.0
    %v466 = vmax.f32 %v370, 0.0
    %v467 = vmax.f32 %v373, 0.0
    %v468 = vmax.f32 %v378, 0.0
    %v469 = vmax.f32 %v381, 0.0
    %v470 = vmax.f32 %v386, 0.0
    %v471 = vmax.f32 %v389, 0.0
    %v472 = vmax.f32 %v394, 0.0
    %v473 = vmax.f32 %v397, 0.0
    %v474 = vmax.f32 %v402, 0.0
    %v475 = vmax.f32 %v405, 0.0
    %v476 = vmax.f32 %v410, 0.0
    %v477 = vmax.f32 %v413, 0.0
    %v478 = vmax.f32 %v418, 0.0
    %v479 = vmax.f32 %v421, 0.0
    %v480 = vmax.f32 %v426, 0.0
    %v481 = vmax.f32 %v429, 0.0
    %v482 = vmax.f32 %v434, 0.0
    %v483 = vmax.f32 %v437, 0.0
    %v484 = vmax.f32 %v442, 0.0
    %v485 = vmax.f32 %v445, 0.0
    %v486 = vmax.f32 %v450, 0.0
    %v487 = vmax.f32 %v453, 0.0
    %v488 = vadd.f32 %v456, %v457
    %v489 = vadd.f32 %v488, %v458
    %v490 = vadd.f32 %v489, %v459
    %v491 = vadd.f32 %v490, %v460
    %v492 = vadd.f32 %v491, %v461
    %v493 = vadd.f32 %v492, %v462
    %v494 = vadd.f32 %v493, %v463
    %v495 = vrot.slane %v494, 4
    %v496 = vadd.f32 %v494, %v495
    %v497 = vrot.slane %v496, 2
    %v498 = vadd.f32 %v496, %v497
    %v499 = vrot.slane %v498, 1
    %v500 = vadd.f32 %v498, %v499
    %v501 = vadd.f32 %v464, %v465
    %v502 = vadd.f32 %v501, %v466
    %v503 = vadd.f32 %v502, %v467
    %v504 = vadd.f32 %v503, %v468
    %v505 = vadd.f32 %v504, %v469
    %v506 = vadd.f32 %v505, %v470
    %v507 = vadd.f32 %v506, %v471
    %v508 = vrot.slane %v507, 4
    %v509 = vadd.f32 %v507, %v508
    %v510 = vrot.slane %v509, 2
    %v511 = vadd.f32 %v509, %v510
    %v512 = vrot.slane %v511, 1
    %v513 = vadd.f32 %v511, %v512
    %v514 = vadd.f32 %v472, %v473
    %v515 = vadd.f32 %v514, %v474
    %v516 = vadd.f32 %v515, %v475
    %v517 = vadd.f32 %v516, %v476
    %v518 = vadd.f32 %v517, %v477
    %v519 = vadd.f32 %v518, %v478
    %v520 = vadd.f32 %v519, %v479
    %v521 = vrot.slane %v520, 4
    %v522 = vadd.f32 %v520, %v521
    %v523 = vrot.slane %v522, 2
    %v524 = vadd.f32 %v522, %v523
    %v525 = vrot.slane %v524, 1
    %v526 = vadd.f32 %v524, %v525
    %v527 = vadd.f32 %v480, %v481
    %v528 = vadd.f32 %v527, %v482
    %v529 = vadd.f32 %v528, %v483
    %v530 = vadd.f32 %v529, %v484
    %v531 = vadd.f32 %v530, %v485
    %v532 = vadd.f32 %v531, %v486
    %v533 = vadd.f32 %v532, %v487
    %v534 = vrot.slane %v533, 4
    %v535 = vadd.f32 %v533, %v534
    %v536 = vrot.slane %v535, 2
    %v537 = vadd.f32 %v535, %v536
    %v538 = vrot.slane %v537, 1
    %v539 = vadd.f32 %v537, %v538
    %v540 = vpack.c.bf16 %v500, %v500
    %v541 = vpack.c.bf16 %v513, %v513
    %v542 = vpack.c.bf16 %v526, %v526
    %v543 = vpack.c.bf16 %v539, %v539
    %v544 = vld [vmem:[#allocation7] sm:$0xf]
    %v545 = vld [vmem:[#allocation7 + $0x4] sm:$0xf]
    %v546 = vld [vmem:[#allocation7 + $0x8] sm:$0xf]
    %v547 = vld [vmem:[#allocation7 + $0xc] sm:$0xf]
    %v548 = vld [vmem:[#allocation7 + $0x10] sm:$0xf]
    %v549 = vld [vmem:[#allocation7 + $0x14] sm:$0xf]
    %v550 = vld [vmem:[#allocation7 + $0x18] sm:$0xf]
    %v551 = vld [vmem:[#allocation7 + $0x1c] sm:$0xf]
    %v552 = vld [vmem:[#allocation7 + $0x20] sm:$0xf]
    %v553 = vld [vmem:[#allocation7 + $0x24] sm:$0xf]
    %v554 = vld [vmem:[#allocation7 + $0x28] sm:$0xf]
    %v555 = vld [vmem:[#allocation7 + $0x2c] sm:$0xf]
    %v556 = vld [vmem:[#allocation7 + $0x30] sm:$0xf]
    %v557 = vld [vmem:[#allocation7 + $0x34] sm:$0xf]
    %v558 = vld [vmem:[#allocation7 + $0x38] sm:$0xf]
    %v559 = vld [vmem:[#allocation7 + $0x3c] sm:$0xf]
    %v560 = vld [vmem:[%s4] sm:$0x1]
    %v562 = vlaneseq
    %v563 = vshrl.u32 %v562, 7
    %v564 = vsub.s32 0, %v563
    %v565 = vrot.slane %v560, %v564
    %v571 = vunpack.c.l.b16 %v540
    %v572 = vunpack.c.l.b16 %v541
    %v573 = vunpack.c.l.b16 %v542
    %v574 = vunpack.c.l.b16 %v543
    %vm575 = vcmask 1041409
    %v576 = vsel %vm575, %v572, %v571
    %vm577 = vcmask 1042434
    %v578 = vsel %vm577, %v573, %v576
    %vm579 = vcmask 1043459
    %v580 = vsel %vm579, %v574, %v578
    %v581 = vpack.c.b16 %v580, %v580
    %v599 = vunpack.c.l.b16 %v544
    %v600 = vunpack.c.l.b16 %v545
    %v601 = vunpack.c.l.b16 %v546
    %v602 = vunpack.c.l.b16 %v547
    %v603 = vunpack.c.l.b16 %v548
    %v604 = vunpack.c.l.b16 %v549
    %v605 = vunpack.c.l.b16 %v550
    %v606 = vunpack.c.l.b16 %v551
    %v607 = vunpack.c.l.b16 %v552
    %v608 = vunpack.c.l.b16 %v553
    %v609 = vunpack.c.l.b16 %v554
    %v610 = vunpack.c.l.b16 %v555
    %v611 = vunpack.c.l.b16 %v556
    %v612 = vunpack.c.l.b16 %v557
    %v613 = vunpack.c.l.b16 %v558
    %v614 = vunpack.c.l.b16 %v559
    %v615 = vpack.c.b16 %v600, %v599
    %v616 = vpack.c.b16 %v602, %v601
    %v617 = vpack.c.b16 %v604, %v603
    %v618 = vpack.c.b16 %v606, %v605
    %v619 = vpack.c.b16 %v608, %v607
    %v620 = vpack.c.b16 %v610, %v609
    %v621 = vpack.c.b16 %v612, %v611
    %v622 = vpack.c.b16 %v614, %v613
    %631 = vmatprep.subr.bf16.mxu0 0
    %632 = vmatpush1.bf16.msra.mxu0 %v615
    %633 = vmatprep.subr.bf16.mxu0 0
    %634 = vmatpush1.bf16.msra.mxu0 %v616
    %635 = vmatprep.subr.bf16.mxu0 0
    %636 = vmatpush1.bf16.msra.mxu0 %v617
    %637 = vmatprep.subr.bf16.mxu0 0
    %638 = vmatpush1.bf16.msra.mxu0 %v618
    %639 = vmatprep.subr.bf16.mxu0 0
    %640 = vmatpush1.bf16.msra.mxu0 %v619
    %641 = vmatprep.subr.bf16.mxu0 0
    %642 = vmatpush1.bf16.msra.mxu0 %v620
    %643 = vmatprep.subr.bf16.mxu0 0
    %644 = vmatpush1.bf16.msra.mxu0 %v621
    %645 = vmatprep.subr.bf16.mxu0 0
    %646 = vmatpush1.bf16.msra.mxu0 %v622
    %647 = vmatprep.subr.bf16.mxu0 0
    %648 = vmatpush1.bf16.msra.mxu0 0
    %649 = vmatprep.subr.bf16.mxu0 0
    %650 = vmatpush1.bf16.msra.mxu0 0
    %651 = vmatprep.subr.bf16.mxu0 0
    %652 = vmatpush1.bf16.msra.mxu0 0
    %653 = vmatprep.subr.bf16.mxu0 0
    %654 = vmatpush1.bf16.msra.mxu0 0
    %655 = vmatprep.subr.bf16.mxu0 0
    %656 = vmatpush1.bf16.msra.mxu0 0
    %657 = vmatprep.subr.bf16.mxu0 0
    %658 = vmatpush1.bf16.msra.mxu0 0
    %659 = vmatprep.subr.bf16.mxu0 0
    %660 = vmatpush1.bf16.msra.mxu0 0
    %661 = vmatprep.subr.bf16.mxu0 0
    %662 = vmatpush1.bf16.msra.mxu0 0
    %663 = vmatprep.mubr.bf16.mxu0 0
    %664 = vmatmul.mubr.bf16.gmra.mrb[0].mxu0 %v581
    %v665 = vpop.f32.mrb[0].mxu0
    %v666 = vadd.f32 %v565, %v665
    %v667 = vpop.f32.mrb[0].mxu0
    %v668 = vpop.f32.mrb[0].mxu0
    %v669 = vpop.f32.mrb[0].mxu0
    %670 = vdwg.mxu0
    %671 = vst [vmem:[#allocation8] sm:$0xf] %v666
    // Predicated region
    $region34: #{tpu_custom_call.1} parent=1 // pred_check
      _
    $region35: #{tpu_custom_call.1} parent=1 // pred_check_branch
      %673 = sbr.rel (0) target = $region37
    $region36: #{tpu_custom_call.1} parent=1 // pred_region
      %s675 = ssub.s32 64, 64
      %676 = vsyncadd [#allocation4], %s675
      %s678 = sshll.u32 [#allocation8], 4
      %s679 = int_to_ptr.vmem [resolvable:$true] %s678
      %681 = dma.vmem_to_hbm [thread:$0]  %s679, 64, %s5, [#allocation4]
    $region37: #{tpu_custom_call.1} parent=1 // pred_fallthru
      _
    // Predicated region
    $region38: #{tpu_custom_call.1} parent=1 // pred_check
      _
    $region39: #{tpu_custom_call.1} parent=1 // pred_check_branch
      %683 = sbr.rel (0) target = $region41
    $region40: #{tpu_custom_call.1} parent=1 // pred_region
      %684 = dma.done [#allocation4], 64
    $region41: #{tpu_custom_call.1} parent=1 // pred_fallthru
      _
    %685 = vsyncpa [#allocation3], 1
    %686 = vsyncpa [#allocation6], 1
    %687 = vsyncpa [#allocation4], 1

</llo_original>
